<compile_context>
chip_gen: v6e
topology: v6e:2x2x1
jax: 0.10.0
libtpu: 0.0.40
codegen_flags: <defaults>
</compile_context>

<pallas_src>
import jax
import jax.numpy as jnp
from jax.experimental import pallas as pl
from jax.experimental.pallas import tpu as pltpu


def _round_up(a, b):
    return -(-a // b) * b


def _tpu_defaults():
    """(physical VMEM bytes per core, # TensorCores per chip) with safe fallbacks."""
    vmem_cap = 128 << 20
    cores = 1
    try:
        info = pltpu.get_tpu_info()
        vmem_cap = int(getattr(info, "vmem_capacity_bytes", vmem_cap))
        cores = 0
        for name in ("num_cores", "core_count", "num_tensorcores", "tensorcore_count"):
            v = getattr(info, name, None)
            if v:
                cores = int(v)
                break
        if not cores:
            # v7x: 64 MiB VMEM per TC and 2 TCs/chip; v5e/v6e: 128 MiB, 1 TC.
            cores = 2 if vmem_cap <= (96 << 20) else 1
    except Exception:
        pass
    return vmem_cap, max(1, cores)


def _make_kernel(B, C, tile_b, tile_c, steps_b, steps_c, multi_c, mask_rows, mask_cols):
    """Kernel over grid (split, row-block, class-block); class axis innermost."""

    def kernel(x_ref, out_ref, *row_state):
        c = pl.program_id(0)     # batch split (per-core on multi-TC chips)
        i = pl.program_id(1)     # row-block within the split
        ci = pl.program_id(2)    # class-block (reduction, innermost)

        @pl.when(jnp.logical_and(i == 0, ci == 0))
        def _init():
            out_ref[...] = jnp.zeros(out_ref.shape, out_ref.dtype)

        x = x_ref[...].astype(jnp.float32)                    # (tile_b, tile_c)

        if mask_cols:
            col = jax.lax.broadcasted_iota(jnp.int32, x.shape, 1) + ci * tile_c
            col_ok = col < C
            mx = jnp.max(jnp.where(col_ok, x, -jnp.inf), axis=-1, keepdims=True)
            z = x - mx
            e = jnp.where(col_ok, jnp.exp(z), 0.0)
            ezt = jnp.where(col_ok, e * z, 0.0)
        else:
            mx = jnp.max(x, axis=-1, keepdims=True)
            z = x - mx
            e = jnp.exp(z)
            ezt = e * z
        se = jnp.sum(e, axis=-1, keepdims=True)               # (tile_b, 1)
        sez = jnp.sum(ezt, axis=-1, keepdims=True)            # (tile_b, 1)

        def finalize(s, ez):
            ent = ez / s - jnp.log(s)                         # sum_c p*log p per row
            if mask_rows:
                row0 = (c * steps_b + i) * tile_b
                rows = jax.lax.broadcasted_iota(jnp.int32, ent.shape, 0) + row0
                ent = jnp.where(rows < B, ent, 0.0)
            # Scalar partial sum for this split, broadcast over the lane-dense
            # (1, 8, 128) resident output block (wrapper reads [c, 0, 0]).
            out_ref[...] = out_ref[...] + jnp.sum(ent)

        if not multi_c:
            finalize(se, sez)
        else:
            m_ref, s_ref, ez_ref = row_state

            @pl.when(ci == 0)
            def _start():
                m_ref[...] = mx
                s_ref[...] = se
                ez_ref[...] = sez

            @pl.when(ci > 0)
            def _update():
                m_old = m_ref[...]
                s_old = s_ref[...]
                ez_old = ez_ref[...]
                m_new = jnp.maximum(m_old, mx)
                alpha = jnp.exp(m_old - m_new)
                beta = jnp.exp(mx - m_new)
                m_ref[...] = m_new
                s_ref[...] = alpha * s_old + beta * se
                ez_ref[...] = (alpha * (ez_old + (m_old - m_new) * s_old)
                               + beta * (sez + (mx - m_new) * se))

            @pl.when(ci == steps_c - 1)
            def _fin():
                finalize(s_ref[...], ez_ref[...])

    return kernel


def conditional_entropy_loss(x, *, tile_b=None, tile_c=None, num_splits=None,
                             target_tile_bytes=None, use_core_parallel=False):
    """Pallas TPU implementation of ConditionalEntropyLoss.forward for (B, C) logits."""
    if x.ndim != 2:
        raise ValueError("expected 2-D logits (batch, classes)")
    B, C = x.shape
    itemsize = jnp.dtype(x.dtype).itemsize
    sub = max(8, 32 // itemsize)                 # sublane tile: 8 f32 / 16 bf16 / 32 int8
    lane_c = _round_up(C, 128)

    vmem_cap, cores = _tpu_defaults()
    vmem_ceiling = (vmem_cap // 8) * 7           # ~56 MiB on v7x, ~112 MiB on v5e/v6e
    tile_budget = vmem_ceiling - (8 << 20)       # headroom for internal scratch etc.
    if target_tile_bytes is None:
        target_tile_bytes = min(16 << 20, max(1 << 20, tile_budget // 3))

    if num_splits is None:
        num_splits = min(2, cores, max(1, B // sub))   # >1 only pays on multi-TC chips
    num_splits = max(1, int(num_splits))

    # ---- class-axis tiling (only for vocab-sized C that cannot fit full width) ----
    if tile_c is None:
        if 2 * sub * lane_c * itemsize > tile_budget:
            tile_c = min(lane_c,
                         max(128, (target_tile_bytes // (sub * itemsize)) // 128 * 128))
        else:
            tile_c = C
    else:
        tile_c = max(128, _round_up(int(tile_c), 128))
    if tile_c >= C:
        tile_c = C
    multi_c = tile_c < C
    steps_c = pl.cdiv(C, tile_c) if multi_c else 1
    mask_cols = multi_c and (C % tile_c != 0)
    lane_tc = tile_c if multi_c else lane_c

    # ---- batch tiling ----
    rows_per_split = pl.cdiv(B, num_splits)
    if tile_b is None:
        tile_b = max(sub, (target_tile_bytes // (lane_tc * itemsize)) // sub * sub)
    tile_b = max(sub, (int(tile_b) // sub) * sub)
    tile_b = min(tile_b, _round_up(rows_per_split, sub))
    row_state_bytes = (3 * 128 * 4) if multi_c else 0      # per-row online m/s/ez scratch
    max_tile_b = max(sub, (tile_budget // (2 * lane_tc * itemsize + row_state_bytes))
                     // sub * sub)
    tile_b = min(tile_b, max_tile_b)
    steps_b = pl.cdiv(rows_per_split, tile_b)
    mask_rows = (num_splits * steps_b * tile_b) != B
    last_row_block = pl.cdiv(B, tile_b) - 1

    grid = (num_splits, steps_b, steps_c)

    def x_index_map(c, i, ci):
        # Clamp so fully-out-of-range row blocks re-read the last valid block;
        # the in-kernel row mask (built from the *unclamped* indices) zeroes them.
        return (jnp.minimum(c * steps_b + i, last_row_block), ci)

    in_specs = [pl.BlockSpec((tile_b, tile_c), x_index_map)]
    out_specs = pl.BlockSpec((1, 8, 128), lambda c, i, ci: (c, 0, 0))
    scratch = ([pltpu.VMEM((tile_b, 1), jnp.float32)] * 3) if multi_c else []

    kernel = _make_kernel(B, C, tile_b, tile_c, steps_b, steps_c,
                          multi_c, mask_rows, mask_cols)

    tile_bytes = tile_b * lane_tc * itemsize
    vmem_limit = int(min(vmem_ceiling,
                         max(32 << 20,
                             2 * tile_bytes + tile_b * row_state_bytes + (8 << 20))))

    cost = pl.CostEstimate(
        flops=6 * B * C,
        transcendentals=B * C,
        bytes_accessed=B * C * itemsize + num_splits * 8 * 128 * 4,
    )

    def run(split_sem):
        return pl.pallas_call(
            kernel,
            out_shape=jax.ShapeDtypeStruct((num_splits, 8, 128), jnp.float32),
            grid_spec=pltpu.PrefetchScalarGridSpec(
                num_scalar_prefetch=0,
                grid=grid,
                in_specs=in_specs,
                out_specs=out_specs,
                scratch_shapes=scratch,
            ),
            compiler_params=pltpu.CompilerParams(
                dimension_semantics=(split_sem, pltpu.ARBITRARY, pltpu.ARBITRARY),
                vmem_limit_bytes=vmem_limit,
            ),
            cost_estimate=cost,
        )(x)

    if num_splits > 1:
        if use_core_parallel:
            # Opt-in explicit per-core sharding of the split axis (v7x); falls
            # back to the documented PARALLEL megacore path if rejected.
            try:
                partials = run(pltpu.CORE_PARALLEL)
            except Exception:
                partials = run(pltpu.PARALLEL)
        else:
            partials = run(pltpu.PARALLEL)
    else:
        partials = run(pltpu.ARBITRARY)

    # -1.0 * mean over the TRUE batch of sum_c softmax*log_softmax
    return (-1.0 / B) * jnp.sum(partials[:, 0, 0])


def _reference(x):
    """Pure-JAX reference matching the PyTorch module."""
    x = x.astype(jnp.float32)
    sm = jax.nn.softmax(x, axis=1)
    lsm = jax.nn.log_softmax(x, axis=1)
    b = jnp.sum(sm * lsm, axis=1)
    return -1.0 * jnp.mean(b, axis=0)


if __name__ == "__main__":
    key = jax.random.PRNGKey(0)

    def check(x, name, atol=1e-5, **kw):
        out = jax.block_until_ready(conditional_entropy_loss(x, **kw))
        ref = _reference(x)
        assert jnp.allclose(out, ref, rtol=1e-4, atol=atol), (name, out, ref)

    # 1) small, evenly divisible batch (default auto tiling)
    x1 = jax.random.normal(key, (16, 32), dtype=jnp.float32)
    check(x1, "basic")

    # 2) batch not divisible by the sublane tile -> in-kernel row masking
    x2 = 3.0 * jax.random.normal(key, (13, 32), dtype=jnp.float32)
    check(x2, "row-mask")

    # 3) forced multi-split, multi-step grid (split axis + row masking)
    x3 = jax.random.normal(key, (300, 32), dtype=jnp.float32)
    check(x3, "multi-split", num_splits=2, tile_b=64)

    # 4) class-axis tiling with online accumulation + column masking (C % tile_c != 0)
    x4 = jax.random.normal(key, (24, 200), dtype=jnp.float32)
    check(x4, "c-tiled", tile_c=128)

    # 5) bf16 input -> dtype-aware (16, 128) sublane rounding
    x5 = jax.random.normal(key, (64, 32), dtype=jnp.float32).astype(jnp.bfloat16)
    check(x5, "bf16", atol=1e-3)

    print("KERNEL_OK")
</pallas_src>

<mosaic_0001>
module attributes {stable_mosaic.version = 11 : i64} {
  func.func @kernel(%arg0: i32, %arg1: i32, %arg2: i32, %arg3: memref<16x32xf32, #tpu.memory_space<vmem>>, %arg4: memref<1x8x128xf32, #tpu.memory_space<vmem>>) attributes {dimension_semantics = [#tpu.dimension_semantics<arbitrary>, #tpu.dimension_semantics<arbitrary>, #tpu.dimension_semantics<arbitrary>], iteration_bounds = array<i64: 1, 1, 1>, scalar_prefetch = 0 : i64, scratch_operands = 0 : i64, tpu.core_type = #tpu.core_type<tc>, window_params = [{transform_indices = @transform_0, window_bounds = array<i64: 16, 32>}, {transform_indices = @transform_1, window_bounds = array<i64: 1, 8, 128>}]} {
    %c0_i32 = arith.constant 0 : i32
    %0 = arith.cmpi eq, %arg1, %c0_i32 : i32
    %c0_i32_0 = arith.constant 0 : i32
    %1 = arith.cmpi eq, %arg2, %c0_i32_0 : i32
    %2 = arith.andi %0, %1 : i1
    %3 = arith.extui %2 : i1 to i32
    %c0_i32_1 = arith.constant 0 : i32
    %4 = arith.cmpi ne, %3, %c0_i32_1 : i32
    scf.if %4 {
      %cst_12 = arith.constant 0.000000e+00 : f32
      %27 = vector.broadcast %cst_12 : f32 to vector<1x8x128xf32>
      %c0_13 = arith.constant 0 : index
      %c0_14 = arith.constant 0 : index
      %c0_15 = arith.constant 0 : index
      %28 = vector.load %arg4[%c0_13, %c0_14, %c0_15] : memref<1x8x128xf32, #tpu.memory_space<vmem>>, vector<1x8x128xf32>
      tpu.vector_store %arg4[%c0_13, %c0_14, %c0_15], %27 {strides = array<i32>} : memref<1x8x128xf32, #tpu.memory_space<vmem>>, vector<1x8x128xf32>,
    } else {
    }
    %c0 = arith.constant 0 : index
    %c0_2 = arith.constant 0 : index
    %5 = vector.load %arg3[%c0, %c0_2] : memref<16x32xf32, #tpu.memory_space<vmem>>, vector<16x32xf32>
    %cst = arith.constant dense<0xFF800000> : vector<16xf32>
    %6 = vector.multi_reduction <maximumf>, %5, %cst [1] : vector<16x32xf32> to vector<16xf32>
    %7 = vector.shape_cast %6 : vector<16xf32> to vector<16x1xf32>
    %8 = vector.broadcast %7 : vector<16x1xf32> to vector<16x32xf32>
    %9 = arith.subf %5, %8 : vector<16x32xf32>
    %10 = math.exp %9 : vector<16x32xf32>
    %11 = arith.mulf %10, %9 : vector<16x32xf32>
    %cst_3 = arith.constant dense<0.000000e+00> : vector<16xf32>
    %12 = vector.multi_reduction <add>, %10, %cst_3 [1] : vector<16x32xf32> to vector<16xf32>
    %13 = vector.shape_cast %12 : vector<16xf32> to vector<16x1xf32>
    %cst_4 = arith.constant dense<0.000000e+00> : vector<16xf32>
    %14 = vector.multi_reduction <add>, %11, %cst_4 [1] : vector<16x32xf32> to vector<16xf32>
    %15 = vector.shape_cast %14 : vector<16xf32> to vector<16x1xf32>
    %16 = arith.divf %15, %13 : vector<16x1xf32>
    %17 = math.log %13 : vector<16x1xf32>
    %18 = arith.subf %16, %17 : vector<16x1xf32>
    %c0_5 = arith.constant 0 : index
    %c0_6 = arith.constant 0 : index
    %c0_7 = arith.constant 0 : index
    %19 = vector.load %arg4[%c0_5, %c0_6, %c0_7] : memref<1x8x128xf32, #tpu.memory_space<vmem>>, vector<1x8x128xf32>
    %20 = vector.shape_cast %18 : vector<16x1xf32> to vector<1x16x1xf32>
    %cst_8 = arith.constant dense<0.000000e+00> : vector<1xf32>
    %21 = vector.multi_reduction <add>, %20, %cst_8 [1, 2] : vector<1x16x1xf32> to vector<1xf32>
    %22 = vector.shape_cast %21 : vector<1xf32> to vector<1x1x1xf32>
    %23 = vector.extract %22[0, 0, 0] : f32 from vector<1x1x1xf32>
    %24 = vector.broadcast %23 : f32 to vector<1x8x128xf32>
    %25 = arith.addf %19, %24 : vector<1x8x128xf32>
    %c0_9 = arith.constant 0 : index
    %c0_10 = arith.constant 0 : index
    %c0_11 = arith.constant 0 : index
    %26 = vector.load %arg4[%c0_9, %c0_10, %c0_11] : memref<1x8x128xf32, #tpu.memory_space<vmem>>, vector<1x8x128xf32>
    tpu.vector_store %arg4[%c0_9, %c0_10, %c0_11], %25 {strides = array<i32>} : memref<1x8x128xf32, #tpu.memory_space<vmem>>, vector<1x8x128xf32>,
    return
  }
  func.func @transform_0(%arg0: i32, %arg1: i32, %arg2: i32) -> (i32, i32) {
    %c1_i32 = arith.constant 1 : i32
    %0 = arith.muli %arg0, %c1_i32 : i32
    %1 = arith.addi %0, %arg1 : i32
    %c0_i32 = arith.constant 0 : i32
    %2 = arith.minsi %1, %c0_i32 : i32
    %c0_i32_0 = arith.constant 0 : i32
    return %2, %arg2 : i32, i32
  }
  func.func @transform_1(%arg0: i32, %arg1: i32, %arg2: i32) -> (i32, i32, i32) {
    %c0_i32 = arith.constant 0 : i32
    %c0_i32_0 = arith.constant 0 : i32
    %c0_i32_1 = arith.constant 0 : i32
    return %arg0, %c0_i32, %c0_i32_0 : i32, i32, i32
  }
}

</mosaic_0001>

<llo_original>
// kernel: tpu_custom_call.1
$region0: #{tpu_custom_call.1}
  #allocation0 [shape = 'u32[]', space=smem, size = 0x4, offset = 0x4, fixed_abs, tag = 'smem constant byte address 0x4 - core index']
  #allocation1 [shape = 'u32[144,128]{1,0:T(1,128)}', space=vmem, size = 0x12000, scoped, tag = 'internal scratch']
  %s0 = inlined_call_operand.hbm [shape: f32[16,32], index: 0, kind: input, shape index: {}]
  %s1 = inlined_call_operand.hbm [shape: f32[1,8,128], index: 1, kind: output, shape index: {}]
  %s2 = sld [smem:[#allocation0]]
  $region22: #{tpu_custom_call.1} parent=0
    _
  %s4 = ssub.s32 1, %s2
  %s5 = scalar_select 0, %s4, %s2
  $region1: #{tpu_custom_call.1} parent=0
    #allocation2 [shape = 'u8[8192]{0}', space=vmem, size = 0x2000, scoped, tag = 'input window, operand 0, single buffered']
    #allocation3 [shape = 's32[1]{0}', space=sflag, size = 0x4, scoped, tag = 'scoped memory for tpu_custom_call.1']
    #allocation4 [shape = 's32[1]{0}', space=sflag, size = 0x4, scoped, tag = 'scoped memory for tpu_custom_call.1']
    #allocation5 [shape = 'u8[4096]{0}', space=vmem, size = 0x1000, scoped, tag = 'output window, operand 0, single buffered']
    %6 = vsyncpa [#allocation3], 0
    %7 = vsyncpa [#allocation4], 0
    // Predicated region
    $region2: #{tpu_custom_call.1} parent=1 // pred_check
      _
    $region3: #{tpu_custom_call.1} parent=1 // pred_check_branch
      %9 = sbr.rel (0) target = $region5
    $region4: #{tpu_custom_call.1} parent=1 // pred_region
      %s10 = sadd.s32 0, 0
      %p11 = scmp.lt.s32.totalorder %s10, 0
      %s12 = scalar_select %p11, %s10, 0
      %s13 = smul.u32 2, %s12
      %s15 = ssub.s32 256, 256
      %16 = vsyncadd [#allocation3], %s15
      %s17 = smul.addr %s13, 128
      %s18 = scalar_lea.hbm %s0, %s17
      %s19 = sshll.u32 [#allocation2], 4
      %s20 = int_to_ptr.vmem [resolvable:$true] %s19
      %25 = dma.hbm_to_vmem [thread:$0]  %s18, 256, %s20, [#allocation3], 128, 128, 8
    $region5: #{tpu_custom_call.1} parent=1 // pred_fallthru
      _
    // Predicated region
    $region6: #{tpu_custom_call.1} parent=1 // pred_check
      _
    $region7: #{tpu_custom_call.1} parent=1 // pred_check_branch
      %27 = sbr.rel (0) target = $region9
    $region8: #{tpu_custom_call.1} parent=1 // pred_region
      %28 = dma.done [#allocation3], 256
    $region9: #{tpu_custom_call.1} parent=1 // pred_fallthru
      _
    %s29 = sadd.s32 0, 0
    %p30 = scmp.lt.s32.totalorder %s29, 0
    %s31 = scalar_select %p30, %s29, 0
    %s32 = smul.u32 2, %s31
    %p33 = scmp.eq.s32.totalorder 0, 0
    %p34 = scmp.eq.s32.totalorder 0, 0
    %p35 = pnand %p33, %p34
    %p36 = pneg %p35
    // Predicated region
    $region10: #{tpu_custom_call.1} parent=1 // pred_check
      _
    $region11: #{tpu_custom_call.1} parent=1 // pred_check_branch
      %38 = sbr.rel (%p35) target = $region13
    $region12: #{tpu_custom_call.1} parent=1 // pred_region
      %39 = vst [vmem:[#allocation5] sm:$0xff] 0.0
    $region13: #{tpu_custom_call.1} parent=1 // pred_fallthru
      _
    %v40 = vld [vmem:[#allocation2] sm:$0xff]
    %v41 = vld [vmem:[#allocation2 + $0x8] sm:$0xff]
    %vm42 = vcmask 261120
    %v43 = vsel %vm42, %v40, -inf
    %44 = vmax.xlane.f32.xlu0 %v43
    %v45 = vpop.xlane.xlu0 %44
    %v46 = vsel %vm42, %v41, -inf
    %47 = vmax.xlane.f32.xlu0 %v46
    %v48 = vpop.xlane.xlu0 %47
    %v49 = vsub.f32 %v40, %v45
    %v50 = vsub.f32 %v41, %v48
    %v51 = vmul.f32 %v49, 1.442695
    %v52 = vpow.pop %v51
    %v53 = vmul.f32 %v50, 1.442695
    %v54 = vpow.pop %v53
    %v55 = vmul.f32 %v52, %v49
    %v56 = vmul.f32 %v54, %v50
    %v57 = vsel %vm42, %v52, 0.0
    %58 = vadd.xlane.f32.xlu0 %v57
    %v59 = vpop.xlane.xlu0 %58
    %v60 = vsel %vm42, %v54, 0.0
    %61 = vadd.xlane.f32.xlu0 %v60
    %v62 = vpop.xlane.xlu0 %61
    %v63 = vsel %vm42, %v55, 0.0
    %64 = vadd.xlane.f32.xlu0 %v63
    %v65 = vpop.xlane.xlu0 %64
    %v66 = vsel %vm42, %v56, 0.0
    %67 = vadd.xlane.f32.xlu0 %v66
    %v68 = vpop.xlane.xlu0 %67
    %v69 = vrcp.pop %v59
    %v70 = vmul.f32 %v65, %v69
    %v71 = vrcp.pop %v62
    %v72 = vmul.f32 %v68, %v71
    %v73 = vlog2.pop %v59
    %v74 = vmul.f32 %v73, 0.6931472
    %v75 = vlog2.pop %v62
    %v76 = vmul.f32 %v75, 0.6931472
    %v77 = vsub.f32 %v70, %v74
    %v78 = vsub.f32 %v72, %v76
    %v79 = vld [vmem:[#allocation5] sm:$0xff]
    %vm80 = vcmask 7168
    %v81 = vsel %vm80, %v77, 0.0
    %v82 = vsel %vm80, %v78, 0.0
    %v83 = vadd.f32 %v81, %v82
    %84 = vadd.xlane.f32.xlu0 %v83
    %v85 = vpop.xlane.xlu0 %84
    %v86 = vrot.slane %v85, 4
    %v87 = vadd.f32 %v85, %v86
    %v88 = vrot.slane %v87, 2
    %v89 = vadd.f32 %v87, %v88
    %v90 = vrot.slane %v89, 1
    %v91 = vadd.f32 %v89, %v90
    %s92 = vtos %v91
    %v93 = vstv %s92
    %v94 = vadd.f32 %v79, %v93
    %95 = vst [vmem:[#allocation5] sm:$0xff] %v94
    // Predicated region
    $region14: #{tpu_custom_call.1} parent=1 // pred_check
      _
    $region15: #{tpu_custom_call.1} parent=1 // pred_check_branch
      %97 = sbr.rel (0) target = $region17
    $region16: #{tpu_custom_call.1} parent=1 // pred_region
      %s99 = ssub.s32 128, 128
      %100 = vsyncadd [#allocation4], %s99
      %s102 = sshll.u32 [#allocation5], 4
      %s103 = int_to_ptr.vmem [resolvable:$true] %s102
      %105 = dma.vmem_to_hbm [thread:$0]  %s103, 128, %s1, [#allocation4]
    $region17: #{tpu_custom_call.1} parent=1 // pred_fallthru
      _
    // Predicated region
    $region18: #{tpu_custom_call.1} parent=1 // pred_check
      _
    $region19: #{tpu_custom_call.1} parent=1 // pred_check_branch
      %107 = sbr.rel (0) target = $region21
    $region20: #{tpu_custom_call.1} parent=1 // pred_region
      %108 = dma.done [#allocation4], 128
    $region21: #{tpu_custom_call.1} parent=1 // pred_fallthru
      _
    %109 = vsyncpa [#allocation3], 1
    %110 = vsyncpa [#allocation4], 1

</llo_original>
